<compile_context>
chip_gen: v6e
topology: v6e:2x2x1
jax: 0.10.0
libtpu: 0.0.40
codegen_flags: <defaults>
</compile_context>

<pallas_src>
import jax
import jax.numpy as jnp
from jax.experimental import pallas as pl
from jax.experimental.pallas import tpu as pltpu


def _embedder_kernel(src_ref, fused_ref, bias_ref, out_ref):
    """One token tile: one-hot gather straight into the fused (V_pad, D) matrix."""
    tokens = src_ref[...]                                     # (TB, 1) int32
    vpad = fused_ref.shape[0]

    # Single-vreg lane iota, broadcast against the token column -> (TB, V_pad)
    # exact 0/1 one-hot built directly in the matmul operand dtype (bf16: 0/1
    # are exact, so the row selection is exact).
    lane_ids = jax.lax.broadcasted_iota(jnp.int32, (1, vpad), 1)
    onehot = (tokens == lane_ids).astype(fused_ref.dtype)     # (TB, V_pad)

    # Single MXU matmul (gather + mask blend + F->D projection were folded
    # into `fused` in the wrapper), f32 accumulation, plus the bias.
    acc = jnp.dot(onehot, fused_ref[...],
                  preferred_element_type=jnp.float32)         # (TB, D) f32
    out_ref[...] = (acc + bias_ref[...]).astype(out_ref.dtype)


def gumbel_sigmoid_mask(key, logits, k, temperature):
    """GlobalRankedFeatureSelector mask (forward-pass semantics)."""
    u = jax.random.uniform(key, logits.shape, dtype=jnp.float32)
    # Matches the module: -log(-log(clamp(u, 1e-6)) + 1e-6).
    noise = -jnp.log(-jnp.log(jnp.clip(u, 1e-6, None)) + 1e-6)
    soft_probs = jax.nn.sigmoid((logits + noise) / temperature)
    k_eff = min(int(k), logits.shape[0])
    kth_value = jax.lax.stop_gradient(jax.lax.top_k(soft_probs, k_eff)[0][-1])
    hard_mask = (soft_probs >= kth_value).astype(jnp.float32)
    # straight-through: value == hard_mask, grads flow through soft_probs
    return jax.lax.stop_gradient(hard_mask - soft_probs) + soft_probs


def _round_up(x, m):
    return (x + m - 1) // m * m


def embedder_forward(src, table, mask, w, b, *, selector_scale=1.0,
                     token_block=2048, out_dtype=jnp.float32):
    """src: (B, T) int32 ids; returns (B, T, D) embeddings in `out_dtype`.

    table: (V, F) cbfv embedding (row 0 = zero padding row)
    mask:  (F,)   straight-through selector mask (value == hard mask)
    w:     (F, D) fc_mat2vec weight stored transposed (x @ w == nn.Linear)
    b:     (D,)   fc_mat2vec bias
    """
    B, T = src.shape
    N = B * T
    V, F = table.shape
    D = w.shape[1]

    # --- algebraic fold (exact for the forward pass): -----------------------
    #   ((gather * blend) @ W)  ==  gather @ ((table * blend) @ W)
    blend = (1.0 - selector_scale) + selector_scale * mask.astype(jnp.float32)
    fused = (table.astype(jnp.float32) * blend[None, :]) @ w.astype(jnp.float32)

    # Pad only the vocab axis (the matmul K dim) to 128; D is left exactly as
    # is (block last dim == full array dim), so no output write amplification
    # and no post-kernel slice pass.
    V_pad = _round_up(V, 128)
    fused_p = jnp.zeros((V_pad, D), jnp.float32).at[:V, :].set(fused)
    fused_p = fused_p.astype(jnp.bfloat16)                    # resident MXU operand
    bias_p = b.astype(jnp.float32).reshape(1, D)
    src_flat = src.reshape(N, 1).astype(jnp.int32)

    # Token tile: large enough to amortize the per-grid-step overhead, but
    # capped so the grid keeps >= 2 steps (v7x megacore split) and sublane
    # alignment (multiple of 8) holds.  At the default TB=2048 and D<=128 the
    # double-buffered blocks fit easily under v5e's 16 MiB scoped VMEM.
    tb = min(int(token_block), max(8, _round_up((N + 1) // 2, 8)))
    tb = _round_up(tb, 8)
    grid_n = -(-N // tb)    # ceil; last tile may be ragged (Pallas masks it)

    out_itemsize = jnp.dtype(out_dtype).itemsize
    cost = pl.CostEstimate(
        flops=2 * grid_n * tb * V_pad * D,
        transcendentals=0,
        bytes_accessed=(N * 4                      # token ids
                        + grid_n * V_pad * D * 2   # resident fused table (bf16)
                        + D * 4                    # bias
                        + N * D * out_itemsize))   # output writeback

    out = pl.pallas_call(
        _embedder_kernel,
        out_shape=jax.ShapeDtypeStruct((N, D), out_dtype),
        grid_spec=pltpu.PrefetchScalarGridSpec(
            num_scalar_prefetch=0,
            grid=(grid_n,),
            in_specs=[
                pl.BlockSpec((tb, 1), lambda i: (i, 0)),      # token ids
                pl.BlockSpec((V_pad, D), lambda i: (0, 0)),   # fused table (resident)
                pl.BlockSpec((1, D), lambda i: (0, 0)),       # bias (resident)
            ],
            out_specs=pl.BlockSpec((tb, D), lambda i: (i, 0)),
        ),
        compiler_params=pltpu.CompilerParams(
            dimension_semantics=("parallel",)),
        cost_estimate=cost,
    )(src_flat, fused_p, bias_p)

    return out.reshape(B, T, D)


if __name__ == "__main__":
    # Small shapes consistent with the module:
    #   vocab rows = 1 zero row + 98 element rows = 99
    #   feat_size (mat2vec feature dim) -> 32 (small synthetic)
    #   d_model -> 32, batch = 2, seq = 8, selector_k = 16
    B, T = 2, 8
    VOCAB = 99
    FEAT = 32
    D_MODEL = 32
    SELECTOR_K = 16
    INIT_TEMP = 5.0
    SELECTOR_SCALE = 1.0

    root = jax.random.PRNGKey(0)
    k_cbfv, k_logits, k_w, k_b, k_src, k_noise = jax.random.split(root, 6)

    # cbfv table: row 0 is zeros (padding), rows 1..98 are "mat2vec" features.
    cbfv_rows = jax.random.normal(k_cbfv, (VOCAB - 1, FEAT), dtype=jnp.float32)
    table = jnp.concatenate(
        [jnp.zeros((1, FEAT), dtype=jnp.float32), cbfv_rows], axis=0)

    # GlobalRankedFeatureSelector logits ~ randn * 0.01
    logits = jax.random.normal(k_logits, (FEAT,), dtype=jnp.float32) * 0.01

    # fc_mat2vec: Linear(FEAT, D_MODEL). Store weight transposed as (F, D).
    limit = 1.0 / jnp.sqrt(jnp.float32(FEAT))
    w = jax.random.uniform(k_w, (FEAT, D_MODEL), dtype=jnp.float32,
                           minval=-limit, maxval=limit)
    b = jax.random.uniform(k_b, (D_MODEL,), dtype=jnp.float32,
                           minval=-limit, maxval=limit)

    # Element-id input (0 = padding, 1..98 = elements).
    src = jax.random.randint(k_src, (B, T), minval=0, maxval=VOCAB,
                             dtype=jnp.int32)

    # Feature-selector mask (Gumbel-sigmoid straight-through), tiny glue op.
    mask = gumbel_sigmoid_mask(k_noise, logits, SELECTOR_K, INIT_TEMP)

    out = embedder_forward(src, table, mask, w, b,
                           selector_scale=SELECTOR_SCALE)
    out = jax.block_until_ready(out)

    # Pure-JAX f32 reference for the same forward pass (un-fused path).
    x_ref = table[src]                                     # (B, T, F)
    selected = x_ref * mask.reshape(1, 1, FEAT)
    x_blend = (1.0 - SELECTOR_SCALE) * x_ref + SELECTOR_SCALE * selected
    ref = x_blend @ w + b                                  # (B, T, D)

    assert out.shape == (B, T, D_MODEL)
    # Fused matrix is stored in bf16 for the MXU -> allow bf16-level rounding.
    assert jnp.allclose(out, ref, atol=2e-2, rtol=2e-2)
    print("KERNEL_OK")
</pallas_src>

<mosaic_0001>
module attributes {stable_mosaic.version = 11 : i64} {
  func.func @_embedder_kernel(%arg0: i32, %arg1: memref<8x1xi32, #tpu.memory_space<vmem>>, %arg2: memref<128x32xbf16, #tpu.memory_space<vmem>>, %arg3: memref<1x32xf32, #tpu.memory_space<vmem>>, %arg4: memref<8x32xf32, #tpu.memory_space<vmem>>) attributes {dimension_semantics = [#tpu.dimension_semantics<parallel>], iteration_bounds = array<i64: 2>, scalar_prefetch = 0 : i64, scratch_operands = 0 : i64, tpu.core_type = #tpu.core_type<tc>, window_params = [{transform_indices = @transform_0, window_bounds = array<i64: 8, 1>}, {pipeline_mode = #tpu.pipeline_mode<synchronous>, transform_indices = @transform_1, window_bounds = array<i64: 128, 32>}, {pipeline_mode = #tpu.pipeline_mode<synchronous>, transform_indices = @transform_2, window_bounds = array<i64: 1, 32>}, {transform_indices = @transform_3, window_bounds = array<i64: 8, 32>}]} {
    %c0 = arith.constant 0 : index
    %c0_0 = arith.constant 0 : index
    %0 = vector.load %arg1[%c0, %c0_0] : memref<8x1xi32, #tpu.memory_space<vmem>>, vector<8x1xi32>
    %1 = tpu.iota {dimensions = array<i32: 1>} : vector<1x128xi32>
    %2 = vector.broadcast %0 : vector<8x1xi32> to vector<8x128xi32>
    %3 = vector.broadcast %1 : vector<1x128xi32> to vector<8x128xi32>
    %4 = arith.cmpi eq, %2, %3 : vector<8x128xi32>
    %5 = arith.extui %4 : vector<8x128xi1> to vector<8x128xi32>
    %6 = arith.sitofp %5 : vector<8x128xi32> to vector<8x128xf32>
    %7 = arith.truncf %6 : vector<8x128xf32> to vector<8x128xbf16>
    %c0_1 = arith.constant 0 : index
    %c0_2 = arith.constant 0 : index
    %8 = vector.load %arg2[%c0_1, %c0_2] : memref<128x32xbf16, #tpu.memory_space<vmem>>, vector<128x32xbf16>
    %cst = arith.constant dense<0.000000e+00> : vector<8x32xf32>
    %9 = tpu.matmul %7, %8, %cst {dimension_numbers = #tpu.dot_dimension_numbers<[1], [0], [0], [1], [0, 0, 1, 1], [], []>} : vector<8x128xbf16>, vector<128x32xbf16>, vector<8x32xf32> -> vector<8x32xf32>
    %c0_3 = arith.constant 0 : index
    %c0_4 = arith.constant 0 : index
    %10 = vector.load %arg3[%c0_3, %c0_4] : memref<1x32xf32, #tpu.memory_space<vmem>>, vector<1x32xf32>
    %11 = vector.broadcast %10 : vector<1x32xf32> to vector<8x32xf32>
    %12 = arith.addf %9, %11 : vector<8x32xf32>
    %c0_5 = arith.constant 0 : index
    %c0_6 = arith.constant 0 : index
    %13 = vector.load %arg4[%c0_5, %c0_6] : memref<8x32xf32, #tpu.memory_space<vmem>>, vector<8x32xf32>
    tpu.vector_store %arg4[%c0_5, %c0_6], %12 {strides = array<i32>} : memref<8x32xf32, #tpu.memory_space<vmem>>, vector<8x32xf32>,
    return
  }
  func.func @transform_0(%arg0: i32) -> (i32, i32) {
    %c0_i32 = arith.constant 0 : i32
    %c0_i32_0 = arith.constant 0 : i32
    return %arg0, %c0_i32 : i32, i32
  }
  func.func @transform_1(%arg0: i32) -> (i32, i32) {
    %c0_i32 = arith.constant 0 : i32
    %c0_i32_0 = arith.constant 0 : i32
    %c0_i32_1 = arith.constant 0 : i32
    return %c0_i32, %c0_i32_0 : i32, i32
  }
  func.func @transform_2(%arg0: i32) -> (i32, i32) {
    %c0_i32 = arith.constant 0 : i32
    %c0_i32_0 = arith.constant 0 : i32
    %c0_i32_1 = arith.constant 0 : i32
    return %c0_i32, %c0_i32_0 : i32, i32
  }
  func.func @transform_3(%arg0: i32) -> (i32, i32) {
    %c0_i32 = arith.constant 0 : i32
    %c0_i32_0 = arith.constant 0 : i32
    return %arg0, %c0_i32 : i32, i32
  }
}

</mosaic_0001>

<llo_original>
// kernel: tpu_custom_call.1
$region0: #{tpu_custom_call.1}
  #allocation0 [shape = 'u32[]', space=smem, size = 0x4, offset = 0x4, fixed_abs, tag = 'smem constant byte address 0x4 - core index']
  #allocation1 [shape = 'u32[144,128]{1,0:T(1,128)}', space=vmem, size = 0x12000, scoped, tag = 'internal scratch']
  %s0 = inlined_call_operand.vmem [shape: s32[16,1], index: 0, kind: input, shape index: {}]
  %s1 = inlined_call_operand.vmem [shape: bf16[128,32], index: 1, kind: input, shape index: {}]
  %s2 = inlined_call_operand.vmem [shape: f32[1,32], index: 2, kind: input, shape index: {}]
  %s3 = inlined_call_operand.hbm [shape: f32[16,32], index: 3, kind: output, shape index: {}]
  %s4 = sld [smem:[#allocation0]]
  $region45: #{tpu_custom_call.1} parent=0
    _
  %s6 = ssub.s32 1, %s4
  %s7 = scalar_select 0, %s6, %s4
  $region1: #{tpu_custom_call.1} parent=0
    #allocation2 [shape = 'u8[8192]{0}', space=vmem, size = 0x2000, scoped, tag = 'output window, operand 0']
    #allocation3 [shape = 's32[2]{0}', space=sflag, size = 0x8, scoped, tag = 'scoped memory for tpu_custom_call.1']
    %8 = vsyncpa [#allocation3], 0
    %s9 = scalar_lea.sflag [#allocation3], 1
    %10 = vsyncpa %s9, 0
    loop: start=0, step=1, limit=4
    $region2: #{tpu_custom_call.1} parent=1 // loop_pre_header
      _
    $region3: #{tpu_custom_call.1} parent=1 // loop_header
      %s12 = sphi 0, %s16
      %p13 = scmp.ge.s32.totalorder %s12, 4
      %s22 = sphi 0, %s24
      %s25 = sphi 0, %s22
      %s26 = sphi 0, %s25
      %s42 = sphi 0, %s26
      %s46 = sphi 0, %s46
      %s48 = sphi 0, %s46
      %s49 = sphi 0, %s48
      %s63 = sphi 0, %s49
      %s67 = sphi 0, %s67
      %s69 = sphi 0, %s67
      %s70 = sphi 0, %s69
      %s84 = sphi 0, %s70
      %s90 = sphi 0, %s92
      %s93 = sphi 0, %s90
      %s94 = sphi 0, %s93
      %s110 = sphi 0, %s94
    $region4: #{tpu_custom_call.1} parent=1 // loop_header_branch
      %15 = sbr.rel (%p13) target = $region8
    $region5: #{tpu_custom_call.1} parent=1 // loop_body
      %s17 = ssub.s32 %s12, 1
      %s18 = ssub.s32 %s12, 2
      %s19 = sadd.s32 %s12, 1
      %s20 = ssub.s32 %s12, %s19
      %p21 = scmp.eq.s32.totalorder %s20, 0
      %s23 = sadd.s32 %s22, 1
      %s24 = scalar_select %p21, %s22, %s23
      %p27 = pneg %p21
      %p28 = scmp.eq.s32.totalorder %s12, 1
      %p29 = por %p27, %p28
      %p30 = scmp.ne.s32.totalorder %s22, %s25
      %p31 = scmp.eq.s32.totalorder %s12, 0
      %p32 = por %p30, %p31
      %p33 = scmp.ne.s32.totalorder %s22, %s25
      %p34 = scmp.eq.s32.totalorder %s17, 1
      %p35 = por %p33, %p34
      %p36 = scmp.ne.s32.totalorder %s25, %s26
      %p37 = scmp.eq.s32.totalorder %s17, 0
      %p38 = por %p36, %p37
      %p39 = scmp.ne.s32.totalorder %s25, %s26
      %p40 = scmp.eq.s32.totalorder %s18, 1
      %p41 = por %p39, %p40
      %p43 = scmp.ne.s32.totalorder %s26, %s42
      %p44 = scmp.eq.s32.totalorder %s18, 0
      %p45 = por %p43, %p44
      %s47 = sadd.s32 %s46, 1
      %p50 = scmp.eq.s32.totalorder %s12, 1
      %p51 = scmp.ne.s32.totalorder %s46, %s48
      %p52 = scmp.eq.s32.totalorder %s12, 0
      %p53 = por %p51, %p52
      %p54 = scmp.ne.s32.totalorder %s46, %s48
      %p55 = scmp.eq.s32.totalorder %s17, 1
      %p56 = por %p54, %p55
      %p57 = scmp.ne.s32.totalorder %s48, %s49
      %p58 = scmp.eq.s32.totalorder %s17, 0
      %p59 = por %p57, %p58
      %p60 = scmp.ne.s32.totalorder %s48, %s49
      %p61 = scmp.eq.s32.totalorder %s18, 1
      %p62 = por %p60, %p61
      %p64 = scmp.ne.s32.totalorder %s49, %s63
      %p65 = scmp.eq.s32.totalorder %s18, 0
      %p66 = por %p64, %p65
      %s68 = sadd.s32 %s67, 1
      %p71 = scmp.eq.s32.totalorder %s12, 1
      %p72 = scmp.ne.s32.totalorder %s67, %s69
      %p73 = scmp.eq.s32.totalorder %s12, 0
      %p74 = por %p72, %p73
      %p75 = scmp.ne.s32.totalorder %s67, %s69
      %p76 = scmp.eq.s32.totalorder %s17, 1
      %p77 = por %p75, %p76
      %p78 = scmp.ne.s32.totalorder %s69, %s70
      %p79 = scmp.eq.s32.totalorder %s17, 0
      %p80 = por %p78, %p79
      %p81 = scmp.ne.s32.totalorder %s69, %s70
      %p82 = scmp.eq.s32.totalorder %s18, 1
      %p83 = por %p81, %p82
      %p85 = scmp.ne.s32.totalorder %s70, %s84
      %p86 = scmp.eq.s32.totalorder %s18, 0
      %p87 = por %p85, %p86
      %s88 = ssub.s32 %s12, %s19
      %p89 = scmp.eq.s32.totalorder %s88, 0
      %s91 = sadd.s32 %s90, 1
      %s92 = scalar_select %p89, %s90, %s91
      %p95 = pneg %p89
      %p96 = scmp.eq.s32.totalorder %s12, 1
      %p97 = por %p95, %p96
      %p98 = scmp.ne.s32.totalorder %s90, %s93
      %p99 = scmp.eq.s32.totalorder %s12, 0
      %p100 = por %p98, %p99
      %p101 = scmp.ne.s32.totalorder %s90, %s93
      %p102 = scmp.eq.s32.totalorder %s17, 1
      %p103 = por %p101, %p102
      %p104 = scmp.ne.s32.totalorder %s93, %s94
      %p105 = scmp.eq.s32.totalorder %s17, 0
      %p106 = por %p104, %p105
      %p107 = scmp.ne.s32.totalorder %s93, %s94
      %p108 = scmp.eq.s32.totalorder %s18, 1
      %p109 = por %p107, %p108
      %p111 = scmp.ne.s32.totalorder %s94, %s110
      %p112 = scmp.eq.s32.totalorder %s18, 0
      %p113 = por %p111, %p112
      %p114 = scmp.le.s32.totalorder 1, %s12
      %p115 = scmp.lt.s32.totalorder %s12, 3
      %p116 = pnand %p114, %p115
      %p117 = pneg %p116
      // Predicated region
      $region9: #{tpu_custom_call.1} parent=5 // pred_check
        _
      $region10: #{tpu_custom_call.1} parent=5 // pred_check_branch
        %119 = sbr.rel (%p116) target = $region12
      $region11: #{tpu_custom_call.1} parent=5 // pred_region
        %s120 = ssub.s32 %s12, 1
        // Predicated region
        $region13: #{tpu_custom_call.1} parent=11 // pred_check
          %p121 = pneg %p59
        $region14: #{tpu_custom_call.1} parent=11 // pred_check_branch
          %123 = sbr.rel (%p121) target = $region16
        $region15: #{tpu_custom_call.1} parent=11 // pred_region
          _
        $region16: #{tpu_custom_call.1} parent=11 // pred_fallthru
          _
        // Predicated region
        $region17: #{tpu_custom_call.1} parent=11 // pred_check
          %p124 = pneg %p80
        $region18: #{tpu_custom_call.1} parent=11 // pred_check_branch
          %126 = sbr.rel (%p124) target = $region20
        $region19: #{tpu_custom_call.1} parent=11 // pred_region
          _
        $region20: #{tpu_custom_call.1} parent=11 // pred_fallthru
          _
      $region12: #{tpu_custom_call.1} parent=5 // pred_fallthru
        _
      %p127 = scmp.lt.s32.totalorder %s12, 2
      // Predicated region
      $region21: #{tpu_custom_call.1} parent=5 // pred_check
        %p128 = pneg %p127
      $region22: #{tpu_custom_call.1} parent=5 // pred_check_branch
        %130 = sbr.rel (%p128) target = $region24
      $region23: #{tpu_custom_call.1} parent=5 // pred_region
        // Predicated region
        $region25: #{tpu_custom_call.1} parent=23 // pred_check
          %p131 = pneg %p32
        $region26: #{tpu_custom_call.1} parent=23 // pred_check_branch
          %133 = sbr.rel (%p131) target = $region28
        $region27: #{tpu_custom_call.1} parent=23 // pred_region
          %p134 = scmp.lt.s32.totalorder %s12, 1
          %s135 = scalar_select %p134, %s12, 1
          %s136 = smul.addr %s135, 8
          %s137 = scalar_lea.vmem %s0, %s136
        $region28: #{tpu_custom_call.1} parent=23 // pred_fallthru
          _
      $region24: #{tpu_custom_call.1} parent=5 // pred_fallthru
        _
      %p138 = scmp.le.s32.totalorder 1, %s12
      %p139 = scmp.lt.s32.totalorder %s12, 3
      %p140 = pnand %p138, %p139
      %p141 = pneg %p140
      // Predicated region
      $region29: #{tpu_custom_call.1} parent=5 // pred_check
        _
      $region30: #{tpu_custom_call.1} parent=5 // pred_check_branch
        %143 = sbr.rel (%p140) target = $region32
      $region31: #{tpu_custom_call.1} parent=5 // pred_region
        %s144 = ssub.s32 %s12, 1
        %p145 = scmp.lt.s32.totalorder %s17, 1
        %s146 = scalar_select %p145, %s17, 1
        %s147 = smul.addr %s146, 8
        %s148 = scalar_lea.vmem %s0, %s147
        %p149 = pneg %p38
        %p150 = pneg %p35
        %p151 = pneg %p59
        %p152 = pneg %p56
        %p153 = pneg %p80
        %p154 = pneg %p77
        %p155 = pneg %p106
        %p156 = pneg %p103
        %s157 = sand.u32 %s93, 1
        %s158 = scalar_lea.sflag [#allocation3], %s157
        %s159 = sand.u32 %s93, 1
        %s160 = smul.addr %s159, 8
        %s161 = scalar_lea.vmem [#allocation2], %s160
        %p162 = scmp.lt.s32.totalorder %s17, 1
        %s163 = scalar_select %p162, %s17, 1
        %s164 = smul.addr %s163, 8
        %s165 = scalar_lea.vmem %s0, %s164
        %v167 = vld [vmem:[%s165] sm:$0xff]
        %v168 = vlaneseq
        %v169 = vand.u32 %v168, 127
        %170 = vset.pattern.permute.xlu0 0
        %171 = vperm.xlu0 %170, %v167
        %v172 = vpop.permute.xlu0 %171
        %vm173 = vcmp.eq.s32.totalorder %v172, %v169
        %v174 = vsel %vm173, 1, 0
        %v175 = vcvt.s32.f32 %v174
        %v176 = vpack.c.bf16 %v175, %v175
        %v177 = vld [vmem:[%s1] sm:$0xf]
        %v178 = vld [vmem:[%s1 + $0x4] sm:$0xf]
        %v179 = vld [vmem:[%s1 + $0x8] sm:$0xf]
        %v180 = vld [vmem:[%s1 + $0xc] sm:$0xf]
        %v181 = vld [vmem:[%s1 + $0x10] sm:$0xf]
        %v182 = vld [vmem:[%s1 + $0x14] sm:$0xf]
        %v183 = vld [vmem:[%s1 + $0x18] sm:$0xf]
        %v184 = vld [vmem:[%s1 + $0x1c] sm:$0xf]
        %v185 = vld [vmem:[%s1 + $0x20] sm:$0xf]
        %v186 = vld [vmem:[%s1 + $0x24] sm:$0xf]
        %v187 = vld [vmem:[%s1 + $0x28] sm:$0xf]
        %v188 = vld [vmem:[%s1 + $0x2c] sm:$0xf]
        %v189 = vld [vmem:[%s1 + $0x30] sm:$0xf]
        %v190 = vld [vmem:[%s1 + $0x34] sm:$0xf]
        %v191 = vld [vmem:[%s1 + $0x38] sm:$0xf]
        %v192 = vld [vmem:[%s1 + $0x3c] sm:$0xf]
        %v193 = vld [vmem:[%s2] sm:$0x1]
        %v195 = vlaneseq
        %v196 = vshrl.u32 %v195, 7
        %v197 = vsub.s32 0, %v196
        %v198 = vrot.slane %v193, %v197
        %v216 = vunpack.c.l.b16 %v177
        %v217 = vunpack.c.l.b16 %v178
        %v218 = vunpack.c.l.b16 %v179
        %v219 = vunpack.c.l.b16 %v180
        %v220 = vunpack.c.l.b16 %v181
        %v221 = vunpack.c.l.b16 %v182
        %v222 = vunpack.c.l.b16 %v183
        %v223 = vunpack.c.l.b16 %v184
        %v224 = vunpack.c.l.b16 %v185
        %v225 = vunpack.c.l.b16 %v186
        %v226 = vunpack.c.l.b16 %v187
        %v227 = vunpack.c.l.b16 %v188
        %v228 = vunpack.c.l.b16 %v189
        %v229 = vunpack.c.l.b16 %v190
        %v230 = vunpack.c.l.b16 %v191
        %v231 = vunpack.c.l.b16 %v192
        %v232 = vpack.c.b16 %v217, %v216
        %v233 = vpack.c.b16 %v219, %v218
        %v234 = vpack.c.b16 %v221, %v220
        %v235 = vpack.c.b16 %v223, %v222
        %v236 = vpack.c.b16 %v225, %v224
        %v237 = vpack.c.b16 %v227, %v226
        %v238 = vpack.c.b16 %v229, %v228
        %v239 = vpack.c.b16 %v231, %v230
        %248 = vmatprep.subr.bf16.mxu0 0
        %249 = vmatpush1.bf16.msra.mxu0 %v239
        %250 = vmatprep.subr.bf16.mxu0 0
        %251 = vmatpush1.bf16.msra.mxu0 %v238
        %252 = vmatprep.subr.bf16.mxu0 0
        %253 = vmatpush1.bf16.msra.mxu0 %v237
        %254 = vmatprep.subr.bf16.mxu0 0
        %255 = vmatpush1.bf16.msra.mxu0 %v236
        %256 = vmatprep.subr.bf16.mxu0 0
        %257 = vmatpush1.bf16.msra.mxu0 %v235
        %258 = vmatprep.subr.bf16.mxu0 0
        %259 = vmatpush1.bf16.msra.mxu0 %v234
        %260 = vmatprep.subr.bf16.mxu0 0
        %261 = vmatpush1.bf16.msra.mxu0 %v233
        %262 = vmatprep.subr.bf16.mxu0 0
        %263 = vmatpush1.bf16.msra.mxu0 %v232
        %264 = vmatprep.subr.bf16.mxu0 0
        %265 = vmatpush2.bf16.msra.mxu0 0
        %266 = vmatprep.subr.bf16.mxu0 0
        %267 = vmatpush2.bf16.msra.mxu0 0
        %268 = vmatprep.subr.bf16.mxu0 0
        %269 = vmatpush2.bf16.msra.mxu0 0
        %270 = vmatprep.subr.bf16.mxu0 0
        %271 = vmatpush2.bf16.msra.mxu0 0
        %272 = vmatprep.subr.bf16.mxu0 0
        %273 = vmatpush2.bf16.msra.mxu0 0
        %274 = vmatprep.subr.bf16.mxu0 0
        %275 = vmatpush2.bf16.msra.mxu0 0
        %276 = vmatprep.subr.bf16.mxu0 0
        %277 = vmatpush2.bf16.msra.mxu0 0
        %278 = vmatprep.subr.bf16.mxu0 0
        %279 = vmatpush2.bf16.msra.mxu0 0
        %280 = vmatprep.mubr.bf16.mxu0 0
        %281 = vmatmul.mubr.bf16.gmra.mxu0 %v176
        %v282 = vpop.f32.mrf.mxu0
        %v283 = vadd.f32 %v198, %v282
        %v284 = vpop.f32.mrf.mxu0
        %v285 = vpop.f32.mrf.mxu0
        %v286 = vpop.f32.mrf.mxu0
        %287 = vdwg.mxu0
        %vm288 = vcmask 261120
        %289 = vst.msk [vmem:[%s161] sm:$0xff] %vm288, %v283
        %s290 = sand.u32 %s93, 1
        %s291 = scalar_lea.sflag [#allocation3], %s290
        %s292 = sand.u32 %s93, 1
        %s293 = smul.addr %s292, 8
        %s294 = scalar_lea.vmem [#allocation2], %s293
        // Predicated region
        $region33: #{tpu_custom_call.1} parent=31 // pred_check
          %p295 = pneg %p103
        $region34: #{tpu_custom_call.1} parent=31 // pred_check_branch
          %297 = sbr.rel (%p295) target = $region36
        $region35: #{tpu_custom_call.1} parent=31 // pred_region
          %s299 = ssub.s32 128, 128
          %300 = vsyncadd %s291, %s299
          %s301 = smul.addr %s17, 128
          %s302 = scalar_lea.hbm %s3, %s301
          %s304 = sshll.u32 %s294, 4
          %s305 = int_to_ptr.vmem [resolvable:$true] %s304
          %307 = dma.vmem_to_hbm [thread:$0]  %s305, 128, %s302, %s291
        $region36: #{tpu_custom_call.1} parent=31 // pred_fallthru
          _
      $region32: #{tpu_custom_call.1} parent=5 // pred_fallthru
        _
      %p308 = scmp.le.s32.totalorder 2, %s12
      // Predicated region
      $region37: #{tpu_custom_call.1} parent=5 // pred_check
        %p309 = pneg %p308
      $region38: #{tpu_custom_call.1} parent=5 // pred_check_branch
        %311 = sbr.rel (%p309) target = $region40
      $region39: #{tpu_custom_call.1} parent=5 // pred_region
        %s312 = ssub.s32 %s12, 2
        // Predicated region
        $region41: #{tpu_custom_call.1} parent=39 // pred_check
          %p313 = pneg %p109
        $region42: #{tpu_custom_call.1} parent=39 // pred_check_branch
          %315 = sbr.rel (%p313) target = $region44
        $region43: #{tpu_custom_call.1} parent=39 // pred_region
          %s316 = sand.u32 %s94, 1
          %s317 = scalar_lea.sflag [#allocation3], %s316
          %s318 = sand.u32 %s94, 1
          %s319 = smul.addr %s318, 8
          %s320 = scalar_lea.vmem [#allocation2], %s319
          %321 = dma.done %s317, 128
        $region44: #{tpu_custom_call.1} parent=39 // pred_fallthru
          _
      $region40: #{tpu_custom_call.1} parent=5 // pred_fallthru
        _
    $region6: #{tpu_custom_call.1} parent=1 // loop_footer
      %s16 = sadd.s32 1, %s12
    $region7: #{tpu_custom_call.1} parent=1 // loop_footer_branch
      %11 = sbr.rel target = $region3
    $region8: #{tpu_custom_call.1} parent=1 // loop_exit
      _
    %322 = vsyncpa [#allocation3], 1
    %s323 = scalar_lea.sflag [#allocation3], 1
    %324 = vsyncpa %s323, 1

</llo_original>
